<compile_context>
chip_gen: v5e
topology: v5e:2x2
jax: 0.10.0
libtpu: 0.0.40
codegen_flags: <defaults>
</compile_context>

<pallas_src>
import functools
import math

import jax
import jax.numpy as jnp
from jax.experimental import pallas as pl
from jax.experimental.pallas import tpu as pltpu


def _copy_kernel(x_ref, o_ref):
    # Identity copy of one (block_rows, lanes) tile. The reshape itself is
    # metadata; this streams the flattened buffer HBM -> VMEM -> HBM, writing
    # each tile back to the same (aliased) HBM location it was read from.
    o_ref[...] = x_ref[...]


def _resolve_size(numel, size):
    """Resolve a single -1 in `size`, mimicking torch.Tensor.view."""
    size = tuple(int(s) for s in size)
    if -1 in size:
        neg_idx = size.index(-1)
        known = math.prod(s for s in size if s != -1)
        assert numel % known == 0, "view size incompatible with number of elements"
        size = size[:neg_idx] + (numel // known,) + size[neg_idx + 1:]
    assert math.prod(size) == numel, "view size incompatible with number of elements"
    return size


# Sublane packing multiple per element size (f32 -> 8, bf16 -> 16, int8 -> 32).
_SUBLANE = {4: 8, 2: 16, 1: 32}

# ~4 MiB per block: with the input and (aliased) output each double-buffered
# this is ~16 MiB resident, safe inside the 32 MiB scoped VMEM on v6e/v7x and
# under an explicitly raised limit on v5e, while still big enough to amortize
# the ~0.35 us per-grid-step overhead.
_TARGET_BLOCK_BYTES = 4 << 20


def _plan_tiling(numel, itemsize, target_block_bytes=_TARGET_BLOCK_BYTES):
    """Pick (rows, lanes, block_rows, grid) for a lane-dense streaming copy.

    Returns None if no clean (sublane,128)-aligned tiling exists; the caller
    then falls back to a pure metadata reshape (which is exact anyway).
    """
    if numel % 128 != 0:
        return None
    sub = _SUBLANE.get(itemsize, 8)

    # Prefer the widest lane dimension (multiple of 128) that still leaves the
    # row count a multiple of the sublane packing, so gridded blocks tile evenly.
    lanes = None
    for cand in (8192, 4096, 2048, 1024, 512, 256, 128):
        if numel % cand == 0 and (numel // cand) % sub == 0:
            lanes = cand
            break

    if lanes is None:
        # No factorization with rows % sub == 0: use the widest lane factor and
        # a single full-array block if it is small enough.
        for cand in (8192, 4096, 2048, 1024, 512, 256, 128):
            if numel % cand == 0:
                lanes = cand
                break
        rows = numel // lanes
        if rows * lanes * itemsize <= target_block_bytes:
            return rows, lanes, rows, 1
        return None

    rows = numel // lanes
    if rows * lanes * itemsize <= target_block_bytes:
        # Whole array fits in one comfortably-sized block.
        return rows, lanes, rows, 1

    # Grid over rows: largest divisor of `rows` that is a multiple of the
    # sublane packing and keeps the block under the target size.
    max_rows = max(sub, target_block_bytes // (lanes * itemsize))
    best = None
    d = 1
    while d * d <= rows:
        if rows % d == 0:
            for cand in (d, rows // d):
                if cand % sub == 0 and cand <= max_rows and (best is None or cand > best):
                    best = cand
        d += 1
    if best is None:
        return None
    return rows, lanes, best, rows // best


@functools.partial(jax.jit, static_argnums=(1,))
def view_pallas(x, size):
    """Equivalent of torch.Tensor.view(size); data path runs through Pallas."""
    numel = x.size
    out_size = _resolve_size(numel, size)
    itemsize = jnp.dtype(x.dtype).itemsize

    plan = _plan_tiling(numel, itemsize)
    if plan is None:
        # No clean lane-dense tiling (e.g. numel not a multiple of 128).
        # `view` is a pure metadata reshape, so this is exact and optimal.
        return jnp.reshape(x, out_size)

    rows, lanes, block_rows, grid = plan
    slab = jnp.reshape(x, (rows, lanes))  # metadata glue, row-major like torch .view
    nbytes = numel * itemsize

    copied = pl.pallas_call(
        _copy_kernel,
        out_shape=jax.ShapeDtypeStruct((rows, lanes), x.dtype),
        grid=(grid,),
        in_specs=[pl.BlockSpec((block_rows, lanes), lambda i: (i, 0))],
        out_specs=pl.BlockSpec((block_rows, lanes), lambda i: (i, 0)),
        # The "view" output is the same bytes as the input: alias them so no
        # new HBM buffer is allocated for the result.
        input_output_aliases={0: 0},
        compiler_params=pltpu.CompilerParams(
            # Shards the tile loop across both TensorCores on v7x; no-op on
            # single-TC v5e/v6e.
            dimension_semantics=("parallel",),
            # Above the 16 MiB v5e scoped default, comfortably holds the
            # double-buffered ~4 MiB blocks on every generation.
            vmem_limit_bytes=32 << 20,
        ),
        cost_estimate=pl.CostEstimate(
            flops=0, transcendentals=0, bytes_accessed=2 * nbytes),
    )(slab)

    return jnp.reshape(copied, out_size)  # metadata glue


if __name__ == "__main__":
    key = jax.random.PRNGKey(0)

    # Small NCHW input consistent with how View is used in LeNet-style nets
    # (flattening conv features before an FC layer).
    x = jax.random.normal(key, (2, 4, 16, 16), dtype=jnp.float32)

    # View((-1, 4 * 16 * 16)) -> (2, 1024); runs the Pallas copy path.
    out = view_pallas(x, (-1, 4 * 16 * 16))
    out = jax.block_until_ready(out)

    ref = x.reshape(-1, 4 * 16 * 16)
    assert out.shape == (2, 1024)
    assert out.dtype == x.dtype
    assert jnp.array_equal(out, ref)

    # Non-128-multiple element count exercises the exact metadata fallback.
    x2 = jax.random.normal(key, (2, 3, 5, 7), dtype=jnp.float32)
    out2 = jax.block_until_ready(view_pallas(x2, (2, -1)))
    assert out2.shape == (2, 105)
    assert jnp.array_equal(out2, x2.reshape(2, -1))

    print("KERNEL_OK")
</pallas_src>

<mosaic_0001>
module attributes {stable_mosaic.version = 11 : i64} {
  func.func @_copy_kernel(%arg0: i32, %arg1: memref<8x256xf32, #tpu.memory_space<vmem>>, %arg2: memref<8x256xf32, #tpu.memory_space<vmem>>) attributes {dimension_semantics = [#tpu.dimension_semantics<parallel>], iteration_bounds = array<i64: 1>, scalar_prefetch = 0 : i64, scratch_operands = 0 : i64, tpu.core_type = #tpu.core_type<tc>, window_params = [{transform_indices = @transform_0, window_bounds = array<i64: 8, 256>}, {transform_indices = @transform_1, window_bounds = array<i64: 8, 256>}]} {
    %c0 = arith.constant 0 : index
    %c0_0 = arith.constant 0 : index
    %0 = vector.load %arg1[%c0, %c0_0] : memref<8x256xf32, #tpu.memory_space<vmem>>, vector<8x256xf32>
    %c0_1 = arith.constant 0 : index
    %c0_2 = arith.constant 0 : index
    %1 = vector.load %arg2[%c0_1, %c0_2] : memref<8x256xf32, #tpu.memory_space<vmem>>, vector<8x256xf32>
    tpu.vector_store %arg2[%c0_1, %c0_2], %0 {strides = array<i32>} : memref<8x256xf32, #tpu.memory_space<vmem>>, vector<8x256xf32>,
    return
  }
  func.func @transform_0(%arg0: i32) -> (i32, i32) {
    %c0_i32 = arith.constant 0 : i32
    %c0_i32_0 = arith.constant 0 : i32
    return %arg0, %c0_i32 : i32, i32
  }
  func.func @transform_1(%arg0: i32) -> (i32, i32) {
    %c0_i32 = arith.constant 0 : i32
    %c0_i32_0 = arith.constant 0 : i32
    return %arg0, %c0_i32 : i32, i32
  }
}

</mosaic_0001>

<llo_original>
// kernel: view_pallas.1
$region0: #{view_pallas.1}
  #allocation0 [shape = 'u32[]', space=smem, size = 0x4, offset = 0x4, fixed_abs, tag = 'smem constant byte address 0x4 - core index']
  #allocation1 [shape = 'u32[72,128]{1,0:T(1,128)}', space=vmem, size = 0x9000, scoped, tag = 'internal scratch']
  %s0 = inlined_call_operand.vmem [shape: f32[8,256], index: 0, kind: input, shape index: {}, may-alias: {0,1}]
  %s1 = inlined_call_operand.vmem [shape: f32[8,256], index: 1, kind: output, shape index: {}, may-alias: {0,1}]
  %s2 = sld [smem:[#allocation0]]
  $region14: #{view_pallas.1} parent=0
    _
  %s4 = ssub.s32 1, %s2
  %s5 = scalar_select 0, %s4, %s2
  // Predicated region
  $region2: #{view_pallas.1} parent=0 // pred_check
    _
  $region3: #{view_pallas.1} parent=0 // pred_check_branch
    %7 = sbr.rel (0) target = $region5
  $region4: #{view_pallas.1} parent=0 // pred_region
    _
  $region5: #{view_pallas.1} parent=0 // pred_fallthru
    _
  %v8 = vld [vmem:[%s0] sm:$0xff]
  %v9 = vld [vmem:[%s0 + $0x8] sm:$0xff]
  %10 = vst [vmem:[%s1] sm:$0xff] %v8
  %11 = vst [vmem:[%s1 + $0x8] sm:$0xff] %v9
  // Predicated region
  $region6: #{view_pallas.1} parent=0 // pred_check
    _
  $region7: #{view_pallas.1} parent=0 // pred_check_branch
    %13 = sbr.rel (0) target = $region9
  $region8: #{view_pallas.1} parent=0 // pred_region
    _
  $region9: #{view_pallas.1} parent=0 // pred_fallthru
    _
  // Predicated region
  $region10: #{view_pallas.1} parent=0 // pred_check
    _
  $region11: #{view_pallas.1} parent=0 // pred_check_branch
    %15 = sbr.rel (0) target = $region13
  $region12: #{view_pallas.1} parent=0 // pred_region
    _
  $region13: #{view_pallas.1} parent=0 // pred_fallthru
    _

</llo_original>
